<compile_context>
chip_gen: v7x
topology: tpu7x:2x2x1
jax: 0.10.0
libtpu: 0.0.40
codegen_flags: <defaults>
</compile_context>

<pallas_src>
import jax
import jax.numpy as jnp
from jax.experimental import pallas as pl
from jax.experimental.pallas import tpu as pltpu

IN_FEATURES = 10      # K of nn.Linear(10, 1)
PACK = 8              # samples packed per row of the (free) reshaped input
MAX_ROW_TILE = 8192   # packed rows per grid step (= 65536 samples, ~2.6 MiB)


def _packed_linear_kernel(xp_ref, w_ref, b_ref, o_ref):
    """One grid step: (TR, PACK*K) @ (PACK*K, PACK) -> (TR, PACK).

    xp_ref: VMEM (TR, PACK*K)   8 consecutive samples per row (lane-dense).
    w_ref : VMEM (PACK*K, PACK) block-diagonal weight; constant index_map so
                                it stays resident across grid steps.
    b_ref : SMEM (1,)           bias scalar.
    o_ref : VMEM (TR, PACK)     8 sample outputs per row.
    """
    acc = jnp.dot(xp_ref[...], w_ref[...], preferred_element_type=jnp.float32)
    o_ref[...] = (acc + b_ref[0]).astype(o_ref.dtype)


def _pick_row_tile(rows):
    """Row tile over the packed (rows, PACK*K) view.

    Multiple of 8 (sublane granularity) unless the whole array is one tiny
    block (block == full dim is allowed); capped at MAX_ROW_TILE; chosen so
    the grid has >= 2 steps whenever rows allow it (v7x megacore needs >= 2
    'parallel' steps to use both TensorCores).
    """
    if rows <= 16:
        return rows
    half = -(-rows // 2)                          # ceil(rows / 2)
    tr = min(MAX_ROW_TILE, ((half + 7) // 8) * 8)
    return max(8, tr)


def simple_model_forward(x, weight, bias):
    """y = x @ weight.T + bias, matching nn.Linear(10, 1).

    x: (B, 10), weight: (1, 10), bias: (1,)  ->  y: (B, 1)
    """
    B, K = x.shape
    assert K == IN_FEATURES and weight.shape == (1, K) and bias.shape == (1,)

    # Pad the batch to a multiple of PACK so (B,10)->(B/8,80) is a pure
    # row-major merge (free). Only copies x when B % 8 != 0.
    pad = (-B) % PACK
    if pad:
        x = jnp.pad(x, ((0, pad), (0, 0)))
    bp = B + pad
    rows = bp // PACK
    xp = x.reshape(rows, PACK * K)               # free reshape, NO transpose

    # Block-diagonal weight: column p holds w in rows p*K:(p+1)*K, so one
    # (TR, 80) @ (80, 8) dot computes 8 samples' outputs per packed row
    # (the MXU performs the segmented K-reduction for free).
    w = weight.reshape(-1).astype(x.dtype)                           # (K,)
    w_block = jnp.kron(jnp.eye(PACK, dtype=x.dtype), w[:, None])     # (80, 8)
    b_flat = bias.reshape(-1).astype(jnp.float32)                    # (1,)

    tr = _pick_row_tile(rows)
    grid = (pl.cdiv(rows, tr),)

    # Explicit scoped-VMEM budget: double-buffered in/out tiles + resident
    # weight + headroom (v5e's default scoped limit is only ~16 MiB).
    itemsize = jnp.dtype(x.dtype).itemsize
    vmem_bytes = (2 * tr * PACK * K * itemsize    # input tiles (x2 buffers)
                  + 2 * tr * PACK * itemsize      # output tiles (x2 buffers)
                  + PACK * K * PACK * itemsize    # resident weight block
                  + (2 << 20))                    # headroom
    vmem_limit = int(max(vmem_bytes, 16 << 20))

    out = pl.pallas_call(
        _packed_linear_kernel,
        out_shape=jax.ShapeDtypeStruct((rows, PACK), x.dtype),
        grid=grid,
        in_specs=[
            pl.BlockSpec((tr, PACK * K), lambda i: (i, 0)),        # packed x
            pl.BlockSpec((PACK * K, PACK), lambda i: (0, 0)),      # weight (resident)
            pl.BlockSpec(memory_space=pltpu.MemorySpace.SMEM),     # bias scalar
        ],
        out_specs=pl.BlockSpec((tr, PACK), lambda i: (i, 0)),
        compiler_params=pltpu.CompilerParams(
            dimension_semantics=("parallel",),
            vmem_limit_bytes=vmem_limit),
    )(xp, w_block, b_flat)

    # (rows, PACK) -> (bp, 1) is the same flat order; slice off batch padding.
    return out.reshape(bp, 1)[:B]


if __name__ == "__main__":
    key = jax.random.PRNGKey(0)
    kx, kw, kb = jax.random.split(key, 3)

    IN, OUT = 10, 1
    # Deterministic parameter init (mimics nn.Linear uniform(-1/sqrt(in), 1/sqrt(in))).
    bound = 1.0 / jnp.sqrt(jnp.float32(IN))
    weight = jax.random.uniform(kw, (OUT, IN), minval=-bound, maxval=bound,
                                dtype=jnp.float32)
    bias = jax.random.uniform(kb, (OUT,), minval=-bound, maxval=bound,
                              dtype=jnp.float32)

    ok = True
    # tiny single block / padded ragged batch / 2-step "parallel" grid
    for batch in (8, 50, 256):
        xb = jax.random.normal(jax.random.fold_in(kx, batch), (batch, IN),
                               dtype=jnp.float32)
        y = simple_model_forward(xb, weight, bias)
        jax.block_until_ready(y)
        y_ref = xb @ weight.T + bias
        ok = ok and (y.shape == (batch, OUT))
        ok = ok and bool(jnp.allclose(y, y_ref, atol=1e-5, rtol=1e-5))
    assert ok
    print("KERNEL_OK")
</pallas_src>

<mosaic_0001>
module attributes {stable_mosaic.version = 11 : i64} {
  func.func @_packed_linear_kernel(%arg0: i32, %arg1: memref<1x80xf32, #tpu.memory_space<vmem>>, %arg2: memref<80x8xf32, #tpu.memory_space<vmem>>, %arg3: memref<1xf32, #tpu.memory_space<smem>>, %arg4: memref<1x8xf32, #tpu.memory_space<vmem>>) attributes {dimension_semantics = [#tpu.dimension_semantics<parallel>], iteration_bounds = array<i64: 1>, scalar_prefetch = 0 : i64, scratch_operands = 0 : i64, tpu.core_type = #tpu.core_type<tc>, window_params = [{transform_indices = @transform_0, window_bounds = array<i64: 1, 80>}, {pipeline_mode = #tpu.pipeline_mode<synchronous>, transform_indices = @transform_1, window_bounds = array<i64: 80, 8>}, {transform_indices = @transform_2, window_bounds = array<i64: 1>}, {transform_indices = @transform_3, window_bounds = array<i64: 1, 8>}]} {
    %c0 = arith.constant 0 : index
    %c0_0 = arith.constant 0 : index
    %0 = vector.load %arg1[%c0, %c0_0] : memref<1x80xf32, #tpu.memory_space<vmem>>, vector<1x80xf32>
    %c0_1 = arith.constant 0 : index
    %c0_2 = arith.constant 0 : index
    %1 = vector.load %arg2[%c0_1, %c0_2] : memref<80x8xf32, #tpu.memory_space<vmem>>, vector<80x8xf32>
    %cst = arith.constant dense<0.000000e+00> : vector<1x8xf32>
    %2 = tpu.matmul %0, %1, %cst {dimension_numbers = #tpu.dot_dimension_numbers<[1], [0], [0], [1], [0, 0, 1, 1], [], []>} : vector<1x80xf32>, vector<80x8xf32>, vector<1x8xf32> -> vector<1x8xf32>
    %c0_3 = arith.constant 0 : index
    %3 = memref.load %arg3[%c0_3] : memref<1xf32, #tpu.memory_space<smem>>
    %4 = vector.broadcast %3 : f32 to vector<1x8xf32>
    %5 = arith.addf %2, %4 : vector<1x8xf32>
    %c0_4 = arith.constant 0 : index
    %c0_5 = arith.constant 0 : index
    %6 = vector.load %arg4[%c0_4, %c0_5] : memref<1x8xf32, #tpu.memory_space<vmem>>, vector<1x8xf32>
    tpu.vector_store %arg4[%c0_4, %c0_5], %5 {strides = array<i32>} : memref<1x8xf32, #tpu.memory_space<vmem>>, vector<1x8xf32>,
    return
  }
  func.func @transform_0(%arg0: i32) -> (i32, i32) {
    %c0_i32 = arith.constant 0 : i32
    %c0_i32_0 = arith.constant 0 : i32
    return %arg0, %c0_i32 : i32, i32
  }
  func.func @transform_1(%arg0: i32) -> (i32, i32) {
    %c0_i32 = arith.constant 0 : i32
    %c0_i32_0 = arith.constant 0 : i32
    %c0_i32_1 = arith.constant 0 : i32
    return %c0_i32, %c0_i32_0 : i32, i32
  }
  func.func @transform_2(%arg0: i32) -> i32 {
    %c0_i32 = arith.constant 0 : i32
    %c0_i32_0 = arith.constant 0 : i32
    return %c0_i32 : i32
  }
  func.func @transform_3(%arg0: i32) -> (i32, i32) {
    %c0_i32 = arith.constant 0 : i32
    %c0_i32_0 = arith.constant 0 : i32
    return %arg0, %c0_i32 : i32, i32
  }
}

</mosaic_0001>

<llo_original>
// kernel: tpu_custom_call.1
$region0: #{tpu_custom_call.1}
  #allocation0 [shape = 'u32[]', space=smem, size = 0x4, offset = 0x4, fixed_abs, tag = 'smem constant byte address 0x4 - core index']
  #allocation1 [shape = 'u32[144,128]{1,0:T(1,128)}', space=vmem, size = 0x12000, scoped, tag = 'internal scratch']
  #allocation2 [shape = 'f32[1]{0:T(128)S(6)}', space=smem, size = 0x200, scoped, tag = 'scoped memory for tpu_custom_call.1']
  %s0 = inlined_call_operand.vmem [shape: f32[1,80], index: 0, kind: input, shape index: {}]
  %s1 = inlined_call_operand.vmem [shape: f32[80,8], index: 1, kind: input, shape index: {}]
  %s2 = inlined_call_operand.<no memory space> [shape: f32[1], index: 2, kind: input, shape index: {}]
  %s3 = inlined_call_operand.hbm [shape: f32[1,8], index: 3, kind: output, shape index: {}]
  %s4 = sld [smem:[#allocation0]]
  $region22: #{tpu_custom_call.1} parent=0
    _
  %s6 = ssub.s32 1, %s4
  %s7 = scalar_select 0, %s6, %s4
  %8 = sst [smem:[#allocation2]] %s2
  $region1: #{tpu_custom_call.1} parent=0
    #allocation3 [shape = 'u8[512]{0}', space=vmem, size = 0x400, scoped, tag = 'output window, operand 0, single buffered']
    #allocation4 [shape = 's32[1]{0}', space=sflag, size = 0x4, scoped, tag = 'scoped memory for tpu_custom_call.1']
    %9 = vsyncpa [#allocation4], 0
    // Predicated region
    $region2: #{tpu_custom_call.1} parent=1 // pred_check
      _
    $region3: #{tpu_custom_call.1} parent=1 // pred_check_branch
      %11 = sbr.rel (0) target = $region5
    $region4: #{tpu_custom_call.1} parent=1 // pred_region
      _
    $region5: #{tpu_custom_call.1} parent=1 // pred_fallthru
      _
    // Predicated region
    $region6: #{tpu_custom_call.1} parent=1 // pred_check
      _
    $region7: #{tpu_custom_call.1} parent=1 // pred_check_branch
      %13 = sbr.rel (0) target = $region9
    $region8: #{tpu_custom_call.1} parent=1 // pred_region
      _
    $region9: #{tpu_custom_call.1} parent=1 // pred_fallthru
      _
    // Predicated region
    $region10: #{tpu_custom_call.1} parent=1 // pred_check
      _
    $region11: #{tpu_custom_call.1} parent=1 // pred_check_branch
      %15 = sbr.rel (0) target = $region13
    $region12: #{tpu_custom_call.1} parent=1 // pred_region
      _
    $region13: #{tpu_custom_call.1} parent=1 // pred_fallthru
      _
    %v16 = vld [vmem:[%s0] sm:$0x1]
    %v17 = vld [vmem:[%s1] sm:$0xff]
    %v18 = vld [vmem:[%s1 + $0x8] sm:$0xff]
    %v19 = vld [vmem:[%s1 + $0x10] sm:$0xff]
    %v20 = vld [vmem:[%s1 + $0x18] sm:$0xff]
    %v21 = vld [vmem:[%s1 + $0x20] sm:$0xff]
    %v22 = vld [vmem:[%s1 + $0x28] sm:$0xff]
    %v23 = vld [vmem:[%s1 + $0x30] sm:$0xff]
    %v24 = vld [vmem:[%s1 + $0x38] sm:$0xff]
    %v25 = vld [vmem:[%s1 + $0x40] sm:$0xff]
    %v26 = vld [vmem:[%s1 + $0x48] sm:$0xff]
    %s27 = sld [smem:[#allocation2]]
    %v28 = vstv %s27
    %vm29 = vcmask 654336
    %v31 = vsel %vm29, %v16, 0
    %33 = vmatprep.subr.mxu0 0.0
    %34 = vmatpush1.msra.mxu0 %v17
    %35 = vmatprep.subr.mxu0 0.0
    %36 = vmatpush1.msra.mxu0 %v18
    %37 = vmatprep.subr.mxu0 0.0
    %38 = vmatpush1.msra.mxu0 %v19
    %39 = vmatprep.subr.mxu0 0.0
    %40 = vmatpush1.msra.mxu0 %v20
    %41 = vmatprep.subr.mxu0 0.0
    %42 = vmatpush1.msra.mxu0 %v21
    %43 = vmatprep.subr.mxu0 0.0
    %44 = vmatpush1.msra.mxu0 %v22
    %45 = vmatprep.subr.mxu0 0.0
    %46 = vmatpush1.msra.mxu0 %v23
    %47 = vmatprep.subr.mxu0 0.0
    %48 = vmatpush1.msra.mxu0 %v24
    %49 = vmatprep.subr.mxu0 0.0
    %50 = vmatpush1.msra.mxu0 %v25
    %51 = vmatprep.subr.mxu0 0.0
    %52 = vmatpush1.msra.mxu0 %v26
    %53 = vmatprep.subr.mxu0 0.0
    %54 = vmatpush1.msra.mxu0 0.0
    %55 = vmatprep.subr.mxu0 0.0
    %56 = vmatpush1.msra.mxu0 0.0
    %57 = vmatprep.subr.mxu0 0.0
    %58 = vmatpush1.msra.mxu0 0.0
    %59 = vmatprep.subr.mxu0 0.0
    %60 = vmatpush1.msra.mxu0 0.0
    %61 = vmatprep.subr.mxu0 0.0
    %62 = vmatpush1.msra.mxu0 0.0
    %63 = vmatprep.subr.mxu0 0.0
    %64 = vmatpush1.msra.mxu0 0.0
    %65 = vmatprep.subr.mxu0 0.0
    %66 = vmatpush1.msra.mxu0 0.0
    %67 = vmatprep.subr.mxu0 0.0
    %68 = vmatpush1.msra.mxu0 0.0
    %69 = vmatprep.subr.mxu0 0.0
    %70 = vmatpush1.msra.mxu0 0.0
    %71 = vmatprep.subr.mxu0 0.0
    %72 = vmatpush1.msra.mxu0 0.0
    %73 = vmatprep.subr.mxu0 0.0
    %74 = vmatpush1.msra.mxu0 0.0
    %75 = vmatprep.subr.mxu0 0.0
    %76 = vmatpush1.msra.mxu0 0.0
    %77 = vmatprep.subr.mxu0 0.0
    %78 = vmatpush1.msra.mxu0 0.0
    %79 = vmatprep.subr.mxu0 0.0
    %80 = vmatpush1.msra.mxu0 0.0
    %81 = vmatprep.subr.mxu0 0.0
    %82 = vmatpush1.msra.mxu0 0.0
    %83 = vmatprep.subr.mxu0 0.0
    %84 = vmatpush1.msra.mxu0 0.0
    %85 = vmatprep.subr.mxu0 0.0
    %86 = vmatpush1.msra.mxu0 0.0
    %87 = vmatprep.subr.mxu0 0.0
    %88 = vmatpush1.msra.mxu0 0.0
    %89 = vmatprep.subr.mxu0 0.0
    %90 = vmatpush1.msra.mxu0 0.0
    %91 = vmatprep.subr.mxu0 0.0
    %92 = vmatpush1.msra.mxu0 0.0
    %93 = vmatprep.subr.mxu0 0.0
    %94 = vmatpush1.msra.mxu0 0.0
    %95 = vmatprep.subr.mxu0 0.0
    %96 = vmatpush1.msra.mxu0 0.0
    %97 = vmatprep.mubr.f32.mxu0 0.0
    %98 = vmatmul.mubr.f32.gmra.mrb[0].mxu0 %v31
    %v99 = vpop.f32.mrb[0].mxu0
    %v100 = vadd.f32 %v28, %v99
    %v101 = vpop.f32.mrb[0].mxu0
    %102 = vdwg.mxu0
    %vm103 = vcmask 57344
    %104 = vst.msk [vmem:[#allocation3] sm:$0x1] %vm103, %v100
    // Predicated region
    $region14: #{tpu_custom_call.1} parent=1 // pred_check
      _
    $region15: #{tpu_custom_call.1} parent=1 // pred_check_branch
      %106 = sbr.rel (0) target = $region17
    $region16: #{tpu_custom_call.1} parent=1 // pred_region
      %s108 = ssub.s32 16, 16
      %109 = vsyncadd [#allocation4], %s108
      %s111 = sshll.u32 [#allocation3], 4
      %s112 = int_to_ptr.vmem [resolvable:$true] %s111
      %114 = dma.vmem_to_hbm [thread:$0]  %s112, 16, %s3, [#allocation4]
    $region17: #{tpu_custom_call.1} parent=1 // pred_fallthru
      _
    // Predicated region
    $region18: #{tpu_custom_call.1} parent=1 // pred_check
      _
    $region19: #{tpu_custom_call.1} parent=1 // pred_check_branch
      %116 = sbr.rel (0) target = $region21
    $region20: #{tpu_custom_call.1} parent=1 // pred_region
      %117 = dma.done [#allocation4], 16
    $region21: #{tpu_custom_call.1} parent=1 // pred_fallthru
      _
    %118 = vsyncpa [#allocation4], 1

</llo_original>
